<compile_context>
chip_gen: v5e
topology: v5e:2x2
jax: 0.10.0
libtpu: 0.0.40
codegen_flags: <defaults>
</compile_context>

<pallas_src>
import math

import numpy as np
import jax
import jax.numpy as jnp
from jax import lax
from jax.experimental import pallas as pl
from jax.experimental.pallas import tpu as pltpu

# ---------------- small config consistent with the module ----------------
MIN_X, MAX_X = -2.0, 2.0
MIN_Y, MAX_Y = -2.0, 2.0
PPM = 4
NX = int((MAX_X - MIN_X) * PPM)   # 16
NY = int((MAX_Y - MIN_Y) * PPM)   # 16
NUM_INPUT = 9                      # x,y,z,intensity + cluster(3) + xp + yp
C1, C2 = 32, 32                    # num_features=[32, 32]
C_PAD = 128                        # lane-dense output channels (zero-padded from C2)
TN = 128                           # points per grid step; raise to 512-2048 for real clouds
UNROLL = 8                         # manual unroll factor of the per-point scatter loop
NUM_SHARDS = 2                     # leading "parallel" grid axis (2 TensorCores on v7x)


# ---------------- Pallas kernel: MLP + row-RMW scatter_max into canvas ----------------
def _pillar_kernel(cell_ref,                                  # SMEM scalar-prefetch (N_pad,) int32
                   pts_ref, w1_ref, b1_ref, w2_ref, b2_ref,   # VMEM inputs
                   canvas_ref,                                # VMEM output (cells, C_PAD), per-shard
                   h_ref):                                    # VMEM scratch (TN, C_PAD)
    s = pl.program_id(0)           # shard axis ("parallel")
    i = pl.program_id(1)           # point-tile axis ("arbitrary"), canvas resident across it

    @pl.when(i == 0)
    def _():
        canvas_ref[...] = jnp.zeros_like(canvas_ref)

    # --- DynamicPointNet: (Linear + BN(eval, folded) + ReLU) x 2, bf16 on the MXU, f32 accum ---
    x = pts_ref[...]                                                    # (TN, 9) bf16
    h = jnp.dot(x, w1_ref[...], preferred_element_type=jnp.float32) + b1_ref[...]
    h = jnp.maximum(h, 0.0)
    h = jnp.dot(h.astype(w2_ref.dtype), w2_ref[...],
                preferred_element_type=jnp.float32) + b2_ref[...]
    h_ref[...] = jnp.maximum(h, 0.0)                                    # (TN, C_PAD) f32, >= 0

    # --- fused scatter_max: guarded single-row read-modify-write per valid point ---
    # Features are >= 0 and the canvas is zero-initialized, so a running max per
    # canvas row reproduces scatter_max over pillars + indexed canvas assignment.
    tn = pts_ref.shape[0]
    base = (s * pl.num_programs(1) + i) * tn

    def body(m, carry):
        for u in range(UNROLL):                 # static unroll: lets LLO overlap SMEM reads / RMWs
            n = m * UNROLL + u
            cid = cell_ref[base + n]            # scalar from SMEM; -1 => padded/filtered point

            @pl.when(cid >= 0)                  # skip invalid points (also guards OOB dyn-slice)
            def _(cid=cid, n=n):
                row = canvas_ref[pl.ds(cid, 1), :]
                canvas_ref[pl.ds(cid, 1), :] = jnp.maximum(row, h_ref[pl.ds(n, 1), :])
        return carry

    lax.fori_loop(0, tn // UNROLL, body, 0)
    # TODO(synk): for points >> cells, sort points by cell id in the wrapper and do a
    # vectorized running segment-max with contiguous writes instead of random-row RMW.


def pillar_mlp_scatter_max(cell_ids, pts, w1b, b1f, w2b, b2p, batch_size,
                           tn=TN, num_shards=NUM_SHARDS):
    assert tn % UNROLL == 0
    n = pts.shape[0]
    chunk = num_shards * tn
    n_pad = ((n + chunk - 1) // chunk) * chunk
    if n_pad != n:
        pts = jnp.pad(pts, ((0, n_pad - n), (0, 0)))
        cell_ids = jnp.pad(cell_ids, (0, n_pad - n), constant_values=-1)
    blocks_per_shard = n_pad // chunk
    cells = batch_size * NY * NX

    grid_spec = pltpu.PrefetchScalarGridSpec(
        num_scalar_prefetch=1,
        grid=(num_shards, blocks_per_shard),
        in_specs=[
            pl.BlockSpec((tn, NUM_INPUT),
                         lambda s, i, cell, bps=blocks_per_shard: (s * bps + i, 0)),
            pl.BlockSpec((NUM_INPUT, C1), lambda s, i, cell: (0, 0)),
            pl.BlockSpec((1, C1), lambda s, i, cell: (0, 0)),
            pl.BlockSpec((C1, C_PAD), lambda s, i, cell: (0, 0)),
            pl.BlockSpec((1, C_PAD), lambda s, i, cell: (0, 0)),
        ],
        # one resident, lane-dense partial canvas per shard
        out_specs=pl.BlockSpec((None, cells, C_PAD), lambda s, i, cell: (s, 0, 0)),
        scratch_shapes=[pltpu.VMEM((tn, C_PAD), jnp.float32)],
    )
    return pl.pallas_call(
        _pillar_kernel,
        out_shape=jax.ShapeDtypeStruct((num_shards, cells, C_PAD), jnp.float32),
        grid_spec=grid_spec,
        compiler_params=pltpu.CompilerParams(
            dimension_semantics=("parallel", "arbitrary")),
    )(cell_ids, pts, w1b, b1f, w2b, b2p)


# ---------------- glue: filtering, pillar keys, decorate, layout ----------------
@jax.jit
def pointpillar_forward(lidar, num_points, w1f, b1f, w2f, b2f):
    # lidar: (B, P, 4) float32 [x, y, z, intensity]; num_points: (B,) int32
    B, P, _ = lidar.shape
    x, y = lidar[..., 0], lidar[..., 1]
    idx = jnp.arange(P)[None, :]
    keep = ((x >= MIN_X) & (x < MAX_X) & (y >= MIN_Y) & (y < MAX_Y)
            & (idx < num_points[:, None]))

    # grid_locations: coords = ((x, y) - (min_x, min_y)) * ppm, truncated to int
    cx = ((x - MIN_X) * PPM).astype(jnp.int32)     # coords column 1
    cy = ((y - MIN_Y) * PPM).astype(jnp.int32)     # coords column 2
    bidx = jnp.broadcast_to(jnp.arange(B)[:, None], (B, P))

    # flat pillar key replaces torch.unique(return_inverse=True) on (b, cx, cy)
    num_pillar_slots = B * NX * NY
    pkey = jnp.where(keep, (bidx * NX + cx) * NY + cy, num_pillar_slots)
    pkey_flat = pkey.reshape(B * P)

    # scatter_mean of xyz over pillars (decorate preprocessing; no_grad in torch)
    xyz = lidar[..., :3]
    xyz_flat = (xyz * keep[..., None]).reshape(B * P, 3)
    sums = jax.ops.segment_sum(xyz_flat, pkey_flat, num_segments=num_pillar_slots + 1)
    cnts = jax.ops.segment_sum(keep.astype(jnp.float32).reshape(-1), pkey_flat,
                               num_segments=num_pillar_slots + 1)
    means = sums / jnp.maximum(cnts, 1.0)[:, None]
    mean_pp = means[pkey_flat].reshape(B, P, 3)

    # decorate (matches reference: coord col 2 -> x_centers, coord col 1 -> y_centers)
    x_centers = cy.astype(lidar.dtype) / PPM + MIN_X
    y_centers = cx.astype(lidar.dtype) / PPM + MIN_Y
    cluster = xyz - mean_pp
    xp = (x - x_centers)[..., None]
    yp = (y - y_centers)[..., None]
    decorated = jnp.concatenate([lidar, cluster, xp, yp], axis=-1)
    decorated = decorated * keep[..., None]        # zero invalid points

    # canvas target: canvas[b, :, clamp(NY-1-coords1), clamp(coords2)]
    row = jnp.clip(NY - 1 - cx, 0, NY - 1)
    col = jnp.clip(cy, 0, NX - 1)
    cell = jnp.where(keep, bidx * (NY * NX) + row * NX + col, -1).astype(jnp.int32)

    pts_flat = decorated.reshape(B * P, NUM_INPUT).astype(jnp.float32)
    cell_flat = cell.reshape(B * P)

    # lane-dense padding of layer 2 + bf16 cast of points/weights (f32 accum in-kernel)
    w2p = jnp.pad(w2f, ((0, 0), (0, C_PAD - C2)))
    b2p = jnp.pad(b2f, ((0, 0), (0, C_PAD - C2)))
    canvas_shards = pillar_mlp_scatter_max(
        cell_flat, pts_flat.astype(jnp.bfloat16),
        w1f.astype(jnp.bfloat16), b1f, w2p.astype(jnp.bfloat16), b2p, B)

    canvas_flat = jnp.max(canvas_shards, axis=0)[:, :C2]          # merge shards, drop pad lanes
    canvas = canvas_flat.reshape(B, NY, NX, C2).transpose(0, 3, 1, 2)   # -> NCHW
    return canvas, pts_flat, cell_flat


# ---------------- deterministic parameter init (BN folded, eval mode) ----------------
def init_params(key):
    def linear(k, nin, nout):
        kw, kb = jax.random.split(k)
        w = jax.random.normal(kw, (nin, nout), jnp.float32) / math.sqrt(nin)
        b = 0.1 * jax.random.normal(kb, (nout,), jnp.float32)
        return w, b

    def bn(k, n):
        kg, kb2, km, kv = jax.random.split(k, 4)
        gamma = 1.0 + 0.1 * jax.random.normal(kg, (n,), jnp.float32)
        beta = 0.1 * jax.random.normal(kb2, (n,), jnp.float32)
        mean = 0.1 * jax.random.normal(km, (n,), jnp.float32)
        var = jax.random.uniform(kv, (n,), jnp.float32, 0.5, 1.5)
        return gamma, beta, mean, var

    k1, k2, k3, k4 = jax.random.split(key, 4)
    w1, b1 = linear(k1, NUM_INPUT, C1)
    g1, be1, m1, v1 = bn(k2, C1)
    w2, b2 = linear(k3, C1, C2)
    g2, be2, m2, v2 = bn(k4, C2)
    eps = 1e-5
    # BatchNorm1d (eval mode / running stats) folded into the preceding Linear
    s1 = g1 / jnp.sqrt(v1 + eps)
    s2 = g2 / jnp.sqrt(v2 + eps)
    w1f = w1 * s1[None, :]
    b1f = (b1 * s1 + be1 - m1 * s1).reshape(1, C1)
    w2f = w2 * s2[None, :]
    b2f = (b2 * s2 + be2 - m2 * s2).reshape(1, C2)
    return w1f, b1f, w2f, b2f


if __name__ == "__main__":
    key = jax.random.PRNGKey(0)
    kp, kl, kz, ki = jax.random.split(key, 4)
    w1f, b1f, w2f, b2f = init_params(kp)

    B, P = 2, 256
    xy = jax.random.uniform(kl, (B, P, 2), jnp.float32, -3.0, 3.0)
    z = jax.random.uniform(kz, (B, P, 1), jnp.float32, -1.0, 1.0)
    inten = jax.random.uniform(ki, (B, P, 1), jnp.float32, 0.0, 1.0)
    lidar = jnp.concatenate([xy, z, inten], axis=-1)        # (B, P, 4)
    num_points = jnp.array([230, 200], jnp.int32)

    canvas, pts_flat, cell_flat = pointpillar_forward(lidar, num_points,
                                                      w1f, b1f, w2f, b2f)
    canvas = jax.block_until_ready(canvas)
    assert canvas.shape == (B, C2, NY, NX)

    # lightweight pure-JAX reference for the Pallas-covered hot path (same bf16 path)
    cells = B * NY * NX
    pts_bf = pts_flat.astype(jnp.bfloat16)
    w1b = w1f.astype(jnp.bfloat16)
    w2p = jnp.pad(w2f, ((0, 0), (0, C_PAD - C2))).astype(jnp.bfloat16)
    b2p = jnp.pad(b2f, ((0, 0), (0, C_PAD - C2)))
    h = jnp.maximum(jnp.dot(pts_bf, w1b, preferred_element_type=jnp.float32) + b1f, 0.0)
    h = jnp.maximum(jnp.dot(h.astype(jnp.bfloat16), w2p,
                            preferred_element_type=jnp.float32) + b2p, 0.0)
    seg = jnp.where(cell_flat >= 0, cell_flat, cells)
    m = jax.ops.segment_max(h, seg, num_segments=cells + 1)
    ref = jnp.maximum(m[:cells, :C2], 0.0).reshape(B, NY, NX, C2).transpose(0, 3, 1, 2)
    assert np.allclose(np.asarray(canvas), np.asarray(ref), atol=1e-2, rtol=1e-2)

    print("KERNEL_OK")
</pallas_src>

<mosaic_0001>
module attributes {stable_mosaic.version = 11 : i64} {
  func.func @_pillar_kernel(%arg0: i32, %arg1: i32, %arg2: memref<512xi32, #tpu.memory_space<smem>>, %arg3: memref<128x9xbf16, #tpu.memory_space<vmem>>, %arg4: memref<9x32xbf16, #tpu.memory_space<vmem>>, %arg5: memref<1x32xf32, #tpu.memory_space<vmem>>, %arg6: memref<32x128xbf16, #tpu.memory_space<vmem>>, %arg7: memref<1x128xf32, #tpu.memory_space<vmem>>, %arg8: memref<1x512x128xf32, #tpu.memory_space<vmem>>, %arg9: memref<128x128xf32, #tpu.memory_space<vmem>>) attributes {dimension_semantics = [#tpu.dimension_semantics<parallel>, #tpu.dimension_semantics<arbitrary>], iteration_bounds = array<i64: 2, 2>, scalar_prefetch = 1 : i64, scratch_operands = 1 : i64, tpu.core_type = #tpu.core_type<tc>, window_params = [{transform_indices = @transform_0, window_bounds = array<i64: 128, 9>}, {pipeline_mode = #tpu.pipeline_mode<synchronous>, transform_indices = @transform_1, window_bounds = array<i64: 9, 32>}, {pipeline_mode = #tpu.pipeline_mode<synchronous>, transform_indices = @transform_2, window_bounds = array<i64: 1, 32>}, {pipeline_mode = #tpu.pipeline_mode<synchronous>, transform_indices = @transform_3, window_bounds = array<i64: 32, 128>}, {pipeline_mode = #tpu.pipeline_mode<synchronous>, transform_indices = @transform_4, window_bounds = array<i64: 1, 128>}, {transform_indices = @transform_5, window_bounds = array<i64: 1, 512, 128>}]} {
    %c0_i32 = arith.constant 0 : i32
    %0 = arith.cmpi eq, %arg1, %c0_i32 : i32
    %1 = arith.extui %0 : i1 to i32
    %c0_i32_0 = arith.constant 0 : i32
    %2 = arith.cmpi ne, %1, %c0_i32_0 : i32
    scf.if %2 {
      %cst_17 = arith.constant 0.000000e+00 : f32
      %24 = vector.broadcast %cst_17 : f32 to vector<512x128xf32>
      %c0_18 = arith.constant 0 : index
      %c0_19 = arith.constant 0 : index
      %c0_20 = arith.constant 0 : index
      %25 = vector.load %arg8[%c0_18, %c0_19, %c0_20] : memref<1x512x128xf32, #tpu.memory_space<vmem>>, vector<1x512x128xf32>
      %26 = vector.shape_cast %25 : vector<1x512x128xf32> to vector<512x128xf32>
      %27 = vector.shape_cast %24 : vector<512x128xf32> to vector<1x512x128xf32>
      tpu.vector_store %arg8[%c0_18, %c0_19, %c0_20], %27 {strides = array<i32>} : memref<1x512x128xf32, #tpu.memory_space<vmem>>, vector<1x512x128xf32>,
    } else {
    }
    %c0 = arith.constant 0 : index
    %c0_1 = arith.constant 0 : index
    %3 = vector.load %arg3[%c0, %c0_1] : memref<128x9xbf16, #tpu.memory_space<vmem>>, vector<128x9xbf16>
    %c0_2 = arith.constant 0 : index
    %c0_3 = arith.constant 0 : index
    %4 = vector.load %arg4[%c0_2, %c0_3] : memref<9x32xbf16, #tpu.memory_space<vmem>>, vector<9x32xbf16>
    %cst = arith.constant dense<0.000000e+00> : vector<128x32xf32>
    %5 = tpu.matmul %3, %4, %cst {dimension_numbers = #tpu.dot_dimension_numbers<[1], [0], [0], [1], [0, 0, 1, 1], [], []>} : vector<128x9xbf16>, vector<9x32xbf16>, vector<128x32xf32> -> vector<128x32xf32>
    %c0_4 = arith.constant 0 : index
    %c0_5 = arith.constant 0 : index
    %6 = vector.load %arg5[%c0_4, %c0_5] : memref<1x32xf32, #tpu.memory_space<vmem>>, vector<1x32xf32>
    %7 = vector.broadcast %6 : vector<1x32xf32> to vector<128x32xf32>
    %8 = arith.addf %5, %7 : vector<128x32xf32>
    %cst_6 = arith.constant 0.000000e+00 : f32
    %9 = vector.broadcast %cst_6 : f32 to vector<128x32xf32>
    %10 = arith.maximumf %8, %9 : vector<128x32xf32>
    %11 = arith.truncf %10 : vector<128x32xf32> to vector<128x32xbf16>
    %c0_7 = arith.constant 0 : index
    %c0_8 = arith.constant 0 : index
    %12 = vector.load %arg6[%c0_7, %c0_8] : memref<32x128xbf16, #tpu.memory_space<vmem>>, vector<32x128xbf16>
    %cst_9 = arith.constant dense<0.000000e+00> : vector<128x128xf32>
    %13 = tpu.matmul %11, %12, %cst_9 {dimension_numbers = #tpu.dot_dimension_numbers<[1], [0], [0], [1], [0, 0, 1, 1], [], []>} : vector<128x32xbf16>, vector<32x128xbf16>, vector<128x128xf32> -> vector<128x128xf32>
    %c0_10 = arith.constant 0 : index
    %c0_11 = arith.constant 0 : index
    %14 = vector.load %arg7[%c0_10, %c0_11] : memref<1x128xf32, #tpu.memory_space<vmem>>, vector<1x128xf32>
    %15 = vector.broadcast %14 : vector<1x128xf32> to vector<128x128xf32>
    %16 = arith.addf %13, %15 : vector<128x128xf32>
    %cst_12 = arith.constant 0.000000e+00 : f32
    %17 = vector.broadcast %cst_12 : f32 to vector<128x128xf32>
    %18 = arith.maximumf %16, %17 : vector<128x128xf32>
    %c0_13 = arith.constant 0 : index
    %c0_14 = arith.constant 0 : index
    %19 = vector.load %arg9[%c0_13, %c0_14] : memref<128x128xf32, #tpu.memory_space<vmem>>, vector<128x128xf32>
    tpu.vector_store %arg9[%c0_13, %c0_14], %18 {strides = array<i32>} : memref<128x128xf32, #tpu.memory_space<vmem>>, vector<128x128xf32>,
    %c2_i32 = arith.constant 2 : i32
    %20 = arith.muli %arg0, %c2_i32 : i32
    %21 = arith.addi %20, %arg1 : i32
    %c128_i32 = arith.constant 128 : i32
    %22 = arith.muli %21, %c128_i32 : i32
    %c0_i32_15 = arith.constant 0 : i32
    %c16_i32 = arith.constant 16 : i32
    %23 = arith.addi %c0_i32_15, %c16_i32 : i32
    %c1_i32 = arith.constant 1 : i32
    scf.for %arg10 = %c0_i32_15 to %23 step %c1_i32  : i32 {
      %c8_i32 = arith.constant 8 : i32
      %24 = arith.muli %arg10, %c8_i32 : i32
      %c0_i32_17 = arith.constant 0 : i32
      %25 = arith.addi %24, %c0_i32_17 : i32
      %26 = arith.addi %22, %25 : i32
      %27 = arith.index_cast %26 : i32 to index
      %28 = memref.load %arg2[%27] : memref<512xi32, #tpu.memory_space<smem>>
      %c0_i32_18 = arith.constant 0 : i32
      %29 = arith.cmpi sge, %28, %c0_i32_18 : i32
      %30 = arith.extui %29 : i1 to i32
      %c0_i32_19 = arith.constant 0 : i32
      %31 = arith.cmpi ne, %30, %c0_i32_19 : i32
      scf.if %31 {
        %c0_43 = arith.constant 0 : index
        %88 = arith.index_cast %28 : i32 to index
        %c0_44 = arith.constant 0 : index
        %89 = vector.load %arg8[%c0_43, %88, %c0_44] : memref<1x512x128xf32, #tpu.memory_space<vmem>>, vector<1x1x128xf32>
        %90 = vector.shape_cast %89 : vector<1x1x128xf32> to vector<1x128xf32>
        %91 = arith.index_cast %25 : i32 to index
        %c0_45 = arith.constant 0 : index
        %92 = vector.load %arg9[%91, %c0_45] : memref<128x128xf32, #tpu.memory_space<vmem>>, vector<1x128xf32>
        %93 = arith.maximumf %90, %92 : vector<1x128xf32>
        %c0_46 = arith.constant 0 : index
        %94 = arith.index_cast %28 : i32 to index
        %c0_47 = arith.constant 0 : index
        %95 = vector.load %arg8[%c0_46, %94, %c0_47] : memref<1x512x128xf32, #tpu.memory_space<vmem>>, vector<1x1x128xf32>
        %96 = vector.shape_cast %95 : vector<1x1x128xf32> to vector<1x128xf32>
        %97 = vector.shape_cast %93 : vector<1x128xf32> to vector<1x1x128xf32>
        tpu.vector_store %arg8[%c0_46, %94, %c0_47], %97 {strides = array<i32>} : memref<1x512x128xf32, #tpu.memory_space<vmem>>, vector<1x1x128xf32>,
      } else {
      }
      %c8_i32_20 = arith.constant 8 : i32
      %32 = arith.muli %arg10, %c8_i32_20 : i32
      %c1_i32_21 = arith.constant 1 : i32
      %33 = arith.addi %32, %c1_i32_21 : i32
      %34 = arith.addi %22, %33 : i32
      %35 = arith.index_cast %34 : i32 to index
      %36 = memref.load %arg2[%35] : memref<512xi32, #tpu.memory_space<smem>>
      %c0_i32_22 = arith.constant 0 : i32
      %37 = arith.cmpi sge, %36, %c0_i32_22 : i32
      %38 = arith.extui %37 : i1 to i32
      %c0_i32_23 = arith.constant 0 : i32
      %39 = arith.cmpi ne, %38, %c0_i32_23 : i32
      scf.if %39 {
        %c0_43 = arith.constant 0 : index
        %88 = arith.index_cast %36 : i32 to index
        %c0_44 = arith.constant 0 : index
        %89 = vector.load %arg8[%c0_43, %88, %c0_44] : memref<1x512x128xf32, #tpu.memory_space<vmem>>, vector<1x1x128xf32>
        %90 = vector.shape_cast %89 : vector<1x1x128xf32> to vector<1x128xf32>
        %91 = arith.index_cast %33 : i32 to index
        %c0_45 = arith.constant 0 : index
        %92 = vector.load %arg9[%91, %c0_45] : memref<128x128xf32, #tpu.memory_space<vmem>>, vector<1x128xf32>
        %93 = arith.maximumf %90, %92 : vector<1x128xf32>
        %c0_46 = arith.constant 0 : index
        %94 = arith.index_cast %36 : i32 to index
        %c0_47 = arith.constant 0 : index
        %95 = vector.load %arg8[%c0_46, %94, %c0_47] : memref<1x512x128xf32, #tpu.memory_space<vmem>>, vector<1x1x128xf32>
        %96 = vector.shape_cast %95 : vector<1x1x128xf32> to vector<1x128xf32>
        %97 = vector.shape_cast %93 : vector<1x128xf32> to vector<1x1x128xf32>
        tpu.vector_store %arg8[%c0_46, %94, %c0_47], %97 {strides = array<i32>} : memref<1x512x128xf32, #tpu.memory_space<vmem>>, vector<1x1x128xf32>,
      } else {
      }
      %c8_i32_24 = arith.constant 8 : i32
      %40 = arith.muli %arg10, %c8_i32_24 : i32
      %c2_i32_25 = arith.constant 2 : i32
      %41 = arith.addi %40, %c2_i32_25 : i32
      %42 = arith.addi %22, %41 : i32
      %43 = arith.index_cast %42 : i32 to index
      %44 = memref.load %arg2[%43] : memref<512xi32, #tpu.memory_space<smem>>
      %c0_i32_26 = arith.constant 0 : i32
      %45 = arith.cmpi sge, %44, %c0_i32_26 : i32
      %46 = arith.extui %45 : i1 to i32
      %c0_i32_27 = arith.constant 0 : i32
      %47 = arith.cmpi ne, %46, %c0_i32_27 : i32
      scf.if %47 {
        %c0_43 = arith.constant 0 : index
        %88 = arith.index_cast %44 : i32 to index
        %c0_44 = arith.constant 0 : index
        %89 = vector.load %arg8[%c0_43, %88, %c0_44] : memref<1x512x128xf32, #tpu.memory_space<vmem>>, vector<1x1x128xf32>
        %90 = vector.shape_cast %89 : vector<1x1x128xf32> to vector<1x128xf32>
        %91 = arith.index_cast %41 : i32 to index
        %c0_45 = arith.constant 0 : index
        %92 = vector.load %arg9[%91, %c0_45] : memref<128x128xf32, #tpu.memory_space<vmem>>, vector<1x128xf32>
        %93 = arith.maximumf %90, %92 : vector<1x128xf32>
        %c0_46 = arith.constant 0 : index
        %94 = arith.index_cast %44 : i32 to index
        %c0_47 = arith.constant 0 : index
        %95 = vector.load %arg8[%c0_46, %94, %c0_47] : memref<1x512x128xf32, #tpu.memory_space<vmem>>, vector<1x1x128xf32>
        %96 = vector.shape_cast %95 : vector<1x1x128xf32> to vector<1x128xf32>
        %97 = vector.shape_cast %93 : vector<1x128xf32> to vector<1x1x128xf32>
        tpu.vector_store %arg8[%c0_46, %94, %c0_47], %97 {strides = array<i32>} : memref<1x512x128xf32, #tpu.memory_space<vmem>>, vector<1x1x128xf32>,
      } else {
      }
      %c8_i32_28 = arith.constant 8 : i32
      %48 = arith.muli %arg10, %c8_i32_28 : i32
      %c3_i32 = arith.constant 3 : i32
      %49 = arith.addi %48, %c3_i32 : i32
      %50 = arith.addi %22, %49 : i32
      %51 = arith.index_cast %50 : i32 to index
      %52 = memref.load %arg2[%51] : memref<512xi32, #tpu.memory_space<smem>>
      %c0_i32_29 = arith.constant 0 : i32
      %53 = arith.cmpi sge, %52, %c0_i32_29 : i32
      %54 = arith.extui %53 : i1 to i32
      %c0_i32_30 = arith.constant 0 : i32
      %55 = arith.cmpi ne, %54, %c0_i32_30 : i32
      scf.if %55 {
        %c0_43 = arith.constant 0 : index
        %88 = arith.index_cast %52 : i32 to index
        %c0_44 = arith.constant 0 : index
        %89 = vector.load %arg8[%c0_43, %88, %c0_44] : memref<1x512x128xf32, #tpu.memory_space<vmem>>, vector<1x1x128xf32>
        %90 = vector.shape_cast %89 : vector<1x1x128xf32> to vector<1x128xf32>
        %91 = arith.index_cast %49 : i32 to index
        %c0_45 = arith.constant 0 : index
        %92 = vector.load %arg9[%91, %c0_45] : memref<128x128xf32, #tpu.memory_space<vmem>>, vector<1x128xf32>
        %93 = arith.maximumf %90, %92 : vector<1x128xf32>
        %c0_46 = arith.constant 0 : index
        %94 = arith.index_cast %52 : i32 to index
        %c0_47 = arith.constant 0 : index
        %95 = vector.load %arg8[%c0_46, %94, %c0_47] : memref<1x512x128xf32, #tpu.memory_space<vmem>>, vector<1x1x128xf32>
        %96 = vector.shape_cast %95 : vector<1x1x128xf32> to vector<1x128xf32>
        %97 = vector.shape_cast %93 : vector<1x128xf32> to vector<1x1x128xf32>
        tpu.vector_store %arg8[%c0_46, %94, %c0_47], %97 {strides = array<i32>} : memref<1x512x128xf32, #tpu.memory_space<vmem>>, vector<1x1x128xf32>,
      } else {
      }
      %c8_i32_31 = arith.constant 8 : i32
      %56 = arith.muli %arg10, %c8_i32_31 : i32
      %c4_i32 = arith.constant 4 : i32
      %57 = arith.addi %56, %c4_i32 : i32
      %58 = arith.addi %22, %57 : i32
      %59 = arith.index_cast %58 : i32 to index
      %60 = memref.load %arg2[%59] : memref<512xi32, #tpu.memory_space<smem>>
      %c0_i32_32 = arith.constant 0 : i32
      %61 = arith.cmpi sge, %60, %c0_i32_32 : i32
      %62 = arith.extui %61 : i1 to i32
      %c0_i32_33 = arith.constant 0 : i32
      %63 = arith.cmpi ne, %62, %c0_i32_33 : i32
      scf.if %63 {
        %c0_43 = arith.constant 0 : index
        %88 = arith.index_cast %60 : i32 to index
        %c0_44 = arith.constant 0 : index
        %89 = vector.load %arg8[%c0_43, %88, %c0_44] : memref<1x512x128xf32, #tpu.memory_space<vmem>>, vector<1x1x128xf32>
        %90 = vector.shape_cast %89 : vector<1x1x128xf32> to vector<1x128xf32>
        %91 = arith.index_cast %57 : i32 to index
        %c0_45 = arith.constant 0 : index
        %92 = vector.load %arg9[%91, %c0_45] : memref<128x128xf32, #tpu.memory_space<vmem>>, vector<1x128xf32>
        %93 = arith.maximumf %90, %92 : vector<1x128xf32>
        %c0_46 = arith.constant 0 : index
        %94 = arith.index_cast %60 : i32 to index
        %c0_47 = arith.constant 0 : index
        %95 = vector.load %arg8[%c0_46, %94, %c0_47] : memref<1x512x128xf32, #tpu.memory_space<vmem>>, vector<1x1x128xf32>
        %96 = vector.shape_cast %95 : vector<1x1x128xf32> to vector<1x128xf32>
        %97 = vector.shape_cast %93 : vector<1x128xf32> to vector<1x1x128xf32>
        tpu.vector_store %arg8[%c0_46, %94, %c0_47], %97 {strides = array<i32>} : memref<1x512x128xf32, #tpu.memory_space<vmem>>, vector<1x1x128xf32>,
      } else {
      }
      %c8_i32_34 = arith.constant 8 : i32
      %64 = arith.muli %arg10, %c8_i32_34 : i32
      %c5_i32 = arith.constant 5 : i32
      %65 = arith.addi %64, %c5_i32 : i32
      %66 = arith.addi %22, %65 : i32
      %67 = arith.index_cast %66 : i32 to index
      %68 = memref.load %arg2[%67] : memref<512xi32, #tpu.memory_space<smem>>
      %c0_i32_35 = arith.constant 0 : i32
      %69 = arith.cmpi sge, %68, %c0_i32_35 : i32
      %70 = arith.extui %69 : i1 to i32
      %c0_i32_36 = arith.constant 0 : i32
      %71 = arith.cmpi ne, %70, %c0_i32_36 : i32
      scf.if %71 {
        %c0_43 = arith.constant 0 : index
        %88 = arith.index_cast %68 : i32 to index
        %c0_44 = arith.constant 0 : index
        %89 = vector.load %arg8[%c0_43, %88, %c0_44] : memref<1x512x128xf32, #tpu.memory_space<vmem>>, vector<1x1x128xf32>
        %90 = vector.shape_cast %89 : vector<1x1x128xf32> to vector<1x128xf32>
        %91 = arith.index_cast %65 : i32 to index
        %c0_45 = arith.constant 0 : index
        %92 = vector.load %arg9[%91, %c0_45] : memref<128x128xf32, #tpu.memory_space<vmem>>, vector<1x128xf32>
        %93 = arith.maximumf %90, %92 : vector<1x128xf32>
        %c0_46 = arith.constant 0 : index
        %94 = arith.index_cast %68 : i32 to index
        %c0_47 = arith.constant 0 : index
        %95 = vector.load %arg8[%c0_46, %94, %c0_47] : memref<1x512x128xf32, #tpu.memory_space<vmem>>, vector<1x1x128xf32>
        %96 = vector.shape_cast %95 : vector<1x1x128xf32> to vector<1x128xf32>
        %97 = vector.shape_cast %93 : vector<1x128xf32> to vector<1x1x128xf32>
        tpu.vector_store %arg8[%c0_46, %94, %c0_47], %97 {strides = array<i32>} : memref<1x512x128xf32, #tpu.memory_space<vmem>>, vector<1x1x128xf32>,
      } else {
      }
      %c8_i32_37 = arith.constant 8 : i32
      %72 = arith.muli %arg10, %c8_i32_37 : i32
      %c6_i32 = arith.constant 6 : i32
      %73 = arith.addi %72, %c6_i32 : i32
      %74 = arith.addi %22, %73 : i32
      %75 = arith.index_cast %74 : i32 to index
      %76 = memref.load %arg2[%75] : memref<512xi32, #tpu.memory_space<smem>>
      %c0_i32_38 = arith.constant 0 : i32
      %77 = arith.cmpi sge, %76, %c0_i32_38 : i32
      %78 = arith.extui %77 : i1 to i32
      %c0_i32_39 = arith.constant 0 : i32
      %79 = arith.cmpi ne, %78, %c0_i32_39 : i32
      scf.if %79 {
        %c0_43 = arith.constant 0 : index
        %88 = arith.index_cast %76 : i32 to index
        %c0_44 = arith.constant 0 : index
        %89 = vector.load %arg8[%c0_43, %88, %c0_44] : memref<1x512x128xf32, #tpu.memory_space<vmem>>, vector<1x1x128xf32>
        %90 = vector.shape_cast %89 : vector<1x1x128xf32> to vector<1x128xf32>
        %91 = arith.index_cast %73 : i32 to index
        %c0_45 = arith.constant 0 : index
        %92 = vector.load %arg9[%91, %c0_45] : memref<128x128xf32, #tpu.memory_space<vmem>>, vector<1x128xf32>
        %93 = arith.maximumf %90, %92 : vector<1x128xf32>
        %c0_46 = arith.constant 0 : index
        %94 = arith.index_cast %76 : i32 to index
        %c0_47 = arith.constant 0 : index
        %95 = vector.load %arg8[%c0_46, %94, %c0_47] : memref<1x512x128xf32, #tpu.memory_space<vmem>>, vector<1x1x128xf32>
        %96 = vector.shape_cast %95 : vector<1x1x128xf32> to vector<1x128xf32>
        %97 = vector.shape_cast %93 : vector<1x128xf32> to vector<1x1x128xf32>
        tpu.vector_store %arg8[%c0_46, %94, %c0_47], %97 {strides = array<i32>} : memref<1x512x128xf32, #tpu.memory_space<vmem>>, vector<1x1x128xf32>,
      } else {
      }
      %c8_i32_40 = arith.constant 8 : i32
      %80 = arith.muli %arg10, %c8_i32_40 : i32
      %c7_i32 = arith.constant 7 : i32
      %81 = arith.addi %80, %c7_i32 : i32
      %82 = arith.addi %22, %81 : i32
      %83 = arith.index_cast %82 : i32 to index
      %84 = memref.load %arg2[%83] : memref<512xi32, #tpu.memory_space<smem>>
      %c0_i32_41 = arith.constant 0 : i32
      %85 = arith.cmpi sge, %84, %c0_i32_41 : i32
      %86 = arith.extui %85 : i1 to i32
      %c0_i32_42 = arith.constant 0 : i32
      %87 = arith.cmpi ne, %86, %c0_i32_42 : i32
      scf.if %87 {
        %c0_43 = arith.constant 0 : index
        %88 = arith.index_cast %84 : i32 to index
        %c0_44 = arith.constant 0 : index
        %89 = vector.load %arg8[%c0_43, %88, %c0_44] : memref<1x512x128xf32, #tpu.memory_space<vmem>>, vector<1x1x128xf32>
        %90 = vector.shape_cast %89 : vector<1x1x128xf32> to vector<1x128xf32>
        %91 = arith.index_cast %81 : i32 to index
        %c0_45 = arith.constant 0 : index
        %92 = vector.load %arg9[%91, %c0_45] : memref<128x128xf32, #tpu.memory_space<vmem>>, vector<1x128xf32>
        %93 = arith.maximumf %90, %92 : vector<1x128xf32>
        %c0_46 = arith.constant 0 : index
        %94 = arith.index_cast %84 : i32 to index
        %c0_47 = arith.constant 0 : index
        %95 = vector.load %arg8[%c0_46, %94, %c0_47] : memref<1x512x128xf32, #tpu.memory_space<vmem>>, vector<1x1x128xf32>
        %96 = vector.shape_cast %95 : vector<1x1x128xf32> to vector<1x128xf32>
        %97 = vector.shape_cast %93 : vector<1x128xf32> to vector<1x1x128xf32>
        tpu.vector_store %arg8[%c0_46, %94, %c0_47], %97 {strides = array<i32>} : memref<1x512x128xf32, #tpu.memory_space<vmem>>, vector<1x1x128xf32>,
      } else {
      }
    }
    %c16_i32_16 = arith.constant 16 : i32
    return
  }
  func.func @transform_0(%arg0: i32, %arg1: i32, %arg2: memref<512xi32, #tpu.memory_space<smem>>) -> (i32, i32) {
    %c2_i32 = arith.constant 2 : i32
    %0 = arith.muli %arg0, %c2_i32 : i32
    %1 = arith.addi %0, %arg1 : i32
    %c0_i32 = arith.constant 0 : i32
    %c0_i32_0 = arith.constant 0 : i32
    return %1, %c0_i32 : i32, i32
  }
  func.func @transform_1(%arg0: i32, %arg1: i32, %arg2: memref<512xi32, #tpu.memory_space<smem>>) -> (i32, i32) {
    %c0_i32 = arith.constant 0 : i32
    %c0_i32_0 = arith.constant 0 : i32
    %c0_i32_1 = arith.constant 0 : i32
    return %c0_i32, %c0_i32_0 : i32, i32
  }
  func.func @transform_2(%arg0: i32, %arg1: i32, %arg2: memref<512xi32, #tpu.memory_space<smem>>) -> (i32, i32) {
    %c0_i32 = arith.constant 0 : i32
    %c0_i32_0 = arith.constant 0 : i32
    %c0_i32_1 = arith.constant 0 : i32
    return %c0_i32, %c0_i32_0 : i32, i32
  }
  func.func @transform_3(%arg0: i32, %arg1: i32, %arg2: memref<512xi32, #tpu.memory_space<smem>>) -> (i32, i32) {
    %c0_i32 = arith.constant 0 : i32
    %c0_i32_0 = arith.constant 0 : i32
    %c0_i32_1 = arith.constant 0 : i32
    return %c0_i32, %c0_i32_0 : i32, i32
  }
  func.func @transform_4(%arg0: i32, %arg1: i32, %arg2: memref<512xi32, #tpu.memory_space<smem>>) -> (i32, i32) {
    %c0_i32 = arith.constant 0 : i32
    %c0_i32_0 = arith.constant 0 : i32
    %c0_i32_1 = arith.constant 0 : i32
    return %c0_i32, %c0_i32_0 : i32, i32
  }
  func.func @transform_5(%arg0: i32, %arg1: i32, %arg2: memref<512xi32, #tpu.memory_space<smem>>) -> (i32, i32, i32) {
    %c0_i32 = arith.constant 0 : i32
    %c0_i32_0 = arith.constant 0 : i32
    %c0_i32_1 = arith.constant 0 : i32
    return %arg0, %c0_i32, %c0_i32_0 : i32, i32, i32
  }
}

</mosaic_0001>

<llo_original>
// kernel: pointpillar_forward.1
$region0: #{pointpillar_forward.1}
  #allocation0 [shape = 'u32[]', space=smem, size = 0x4, offset = 0x4, fixed_abs, tag = 'smem constant byte address 0x4 - core index']
  #allocation1 [shape = 'u32[72,128]{1,0:T(1,128)}', space=vmem, size = 0x9000, scoped, tag = 'internal scratch']
  #allocation2 [shape = 'f32[128,128]{1,0:T(8,128)}', space=vmem, size = 0x10000, scoped, tag = 'scratch operand']
  #allocation3 [shape = 's32[1]{0}', space=sflag, size = 0x4, scoped, tag = 'scoped memory for pointpillar_forward.1']
  #allocation4 [shape = 'u8[2048]{0}', space=smem, size = 0x800, scoped, tag = 'prefetched SMEM operand 0']
  %s0 = inlined_call_operand.vmem [shape: s32[512], index: 0, kind: input, shape index: {}]
  %s1 = inlined_call_operand.vmem [shape: bf16[512,9], index: 1, kind: input, shape index: {}]
  %s2 = inlined_call_operand.vmem [shape: bf16[9,32], index: 2, kind: input, shape index: {}]
  %s3 = inlined_call_operand.vmem [shape: f32[1,32], index: 3, kind: input, shape index: {}]
  %s4 = inlined_call_operand.vmem [shape: bf16[32,128], index: 4, kind: input, shape index: {}]
  %s5 = inlined_call_operand.vmem [shape: f32[1,128], index: 5, kind: input, shape index: {}]
  %s6 = inlined_call_operand.vmem [shape: f32[2,512,128], index: 6, kind: output, shape index: {}]
  %s7 = sld [smem:[#allocation0]]
  $region96: #{pointpillar_forward.1} parent=0
    _
  %s9 = ssub.s32 1, %s7
  %s10 = scalar_select 0, %s9, %s7
  %s12 = sshll.u32 %s0, 4
  %s13 = int_to_ptr.vmem [resolvable:$true] %s12
  %15 = dma.vmem_to_smem %s13, 64, [#allocation4], [#allocation3]
  %17 = dma.done [#allocation3], 64
  %18 = sfence
  loop: start=0, step=1, limit=6
  $region2: #{pointpillar_forward.1} parent=0 // loop_pre_header
    _
  $region3: #{pointpillar_forward.1} parent=0 // loop_header
    %s20 = sphi 0, %s24
    %p21 = scmp.ge.s32.totalorder %s20, 6
    %s27 = sphi 0, %s39
    %s28 = sphi 0, %s35
    %s29 = sphi 0, %s27
    %s30 = sphi 0, %s28
    %s31 = sphi 0, %s29
    %s32 = sphi 0, %s30
    %s46 = sphi 0, %s48
    %s49 = sphi 0, %s46
    %s50 = sphi 0, %s49
    %s66 = sphi 0, %s50
    %s70 = sphi 0, %s70
    %s72 = sphi 0, %s70
    %s73 = sphi 0, %s72
    %s87 = sphi 0, %s73
    %s91 = sphi 0, %s91
    %s93 = sphi 0, %s91
    %s94 = sphi 0, %s93
    %s108 = sphi 0, %s94
    %s112 = sphi 0, %s112
    %s114 = sphi 0, %s112
    %s115 = sphi 0, %s114
    %s129 = sphi 0, %s115
    %s133 = sphi 0, %s133
    %s135 = sphi 0, %s133
    %s136 = sphi 0, %s135
    %s150 = sphi 0, %s136
    %s156 = sphi 0, %s158
    %s159 = sphi 0, %s156
    %s160 = sphi 0, %s159
    %s176 = sphi 0, %s160
  $region4: #{pointpillar_forward.1} parent=0 // loop_header_branch
    %23 = sbr.rel (%p21) target = $region8
  $region5: #{pointpillar_forward.1} parent=0 // loop_body
    %s25 = ssub.s32 %s20, 1
    %s26 = ssub.s32 %s20, 2
    %s33 = sadd.s32 1, %s28
    %p34 = scmp.ge.s32.totalorder %s33, 2
    %s35 = scalar_select %p34, 0, %s33
    %s36 = sadd.s32 1, %s27
    %s37 = scalar_select %p34, %s36, %s27
    %p38 = scmp.ge.s32.totalorder %s37, 2
    %s39 = scalar_select %p38, 0, %s37
    %s40 = smul.u32 %s27, 2
    %s41 = sadd.s32 %s40, %s28
    %s42 = smul.u32 %s39, 2
    %s43 = sadd.s32 %s42, %s35
    %s44 = ssub.s32 %s41, %s43
    %p45 = scmp.eq.s32.totalorder %s44, 0
    %s47 = sadd.s32 %s46, 1
    %s48 = scalar_select %p45, %s46, %s47
    %p51 = pneg %p45
    %p52 = scmp.eq.s32.totalorder %s20, 3
    %p53 = por %p51, %p52
    %p54 = scmp.ne.s32.totalorder %s46, %s49
    %p55 = scmp.eq.s32.totalorder %s20, 0
    %p56 = por %p54, %p55
    %p57 = scmp.ne.s32.totalorder %s46, %s49
    %p58 = scmp.eq.s32.totalorder %s25, 3
    %p59 = por %p57, %p58
    %p60 = scmp.ne.s32.totalorder %s49, %s50
    %p61 = scmp.eq.s32.totalorder %s25, 0
    %p62 = por %p60, %p61
    %p63 = scmp.ne.s32.totalorder %s49, %s50
    %p64 = scmp.eq.s32.totalorder %s26, 3
    %p65 = por %p63, %p64
    %p67 = scmp.ne.s32.totalorder %s50, %s66
    %p68 = scmp.eq.s32.totalorder %s26, 0
    %p69 = por %p67, %p68
    %s71 = sadd.s32 %s70, 1
    %p74 = scmp.eq.s32.totalorder %s20, 3
    %p75 = scmp.ne.s32.totalorder %s70, %s72
    %p76 = scmp.eq.s32.totalorder %s20, 0
    %p77 = por %p75, %p76
    %p78 = scmp.ne.s32.totalorder %s70, %s72
    %p79 = scmp.eq.s32.totalorder %s25, 3
    %p80 = por %p78, %p79
    %p81 = scmp.ne.s32.totalorder %s72, %s73
    %p82 = scmp.eq.s32.totalorder %s25, 0
    %p83 = por %p81, %p82
    %p84 = scmp.ne.s32.totalorder %s72, %s73
    %p85 = scmp.eq.s32.totalorder %s26, 3
    %p86 = por %p84, %p85
    %p88 = scmp.ne.s32.totalorder %s73, %s87
    %p89 = scmp.eq.s32.totalorder %s26, 0
    %p90 = por %p88, %p89
    %s92 = sadd.s32 %s91, 1
    %p95 = scmp.eq.s32.totalorder %s20, 3
    %p96 = scmp.ne.s32.totalorder %s91, %s93
    %p97 = scmp.eq.s32.totalorder %s20, 0
    %p98 = por %p96, %p97
    %p99 = scmp.ne.s32.totalorder %s91, %s93
    %p100 = scmp.eq.s32.totalorder %s25, 3
    %p101 = por %p99, %p100
    %p102 = scmp.ne.s32.totalorder %s93, %s94
    %p103 = scmp.eq.s32.totalorder %s25, 0
    %p104 = por %p102, %p103
    %p105 = scmp.ne.s32.totalorder %s93, %s94
    %p106 = scmp.eq.s32.totalorder %s26, 3
    %p107 = por %p105, %p106
    %p109 = scmp.ne.s32.totalorder %s94, %s108
    %p110 = scmp.eq.s32.totalorder %s26, 0
    %p111 = por %p109, %p110
    %s113 = sadd.s32 %s112, 1
    %p116 = scmp.eq.s32.totalorder %s20, 3
    %p117 = scmp.ne.s32.totalorder %s112, %s114
    %p118 = scmp.eq.s32.totalorder %s20, 0
    %p119 = por %p117, %p118
    %p120 = scmp.ne.s32.totalorder %s112, %s114
    %p121 = scmp.eq.s32.totalorder %s25, 3
    %p122 = por %p120, %p121
    %p123 = scmp.ne.s32.totalorder %s114, %s115
    %p124 = scmp.eq.s32.totalorder %s25, 0
    %p125 = por %p123, %p124
    %p126 = scmp.ne.s32.totalorder %s114, %s115
    %p127 = scmp.eq.s32.totalorder %s26, 3
    %p128 = por %p126, %p127
    %p130 = scmp.ne.s32.totalorder %s115, %s129
    %p131 = scmp.eq.s32.totalorder %s26, 0
    %p132 = por %p130, %p131
    %s134 = sadd.s32 %s133, 1
    %p137 = scmp.eq.s32.totalorder %s20, 3
    %p138 = scmp.ne.s32.totalorder %s133, %s135
    %p139 = scmp.eq.s32.totalorder %s20, 0
    %p140 = por %p138, %p139
    %p141 = scmp.ne.s32.totalorder %s133, %s135
    %p142 = scmp.eq.s32.totalorder %s25, 3
    %p143 = por %p141, %p142
    %p144 = scmp.ne.s32.totalorder %s135, %s136
    %p145 = scmp.eq.s32.totalorder %s25, 0
    %p146 = por %p144, %p145
    %p147 = scmp.ne.s32.totalorder %s135, %s136
    %p148 = scmp.eq.s32.totalorder %s26, 3
    %p149 = por %p147, %p148
    %p151 = scmp.ne.s32.totalorder %s136, %s150
    %p152 = scmp.eq.s32.totalorder %s26, 0
    %p153 = por %p151, %p152
    %s154 = ssub.s32 %s27, %s39
    %p155 = scmp.eq.s32.totalorder %s154, 0
    %s157 = sadd.s32 %s156, 1
    %s158 = scalar_select %p155, %s156, %s157
    %p161 = pneg %p155
    %p162 = scmp.eq.s32.totalorder %s20, 3
    %p163 = por %p161, %p162
    %p164 = scmp.ne.s32.totalorder %s156, %s159
    %p165 = scmp.eq.s32.totalorder %s20, 0
    %p166 = por %p164, %p165
    %p167 = scmp.ne.s32.totalorder %s156, %s159
    %p168 = scmp.eq.s32.totalorder %s25, 3
    %p169 = por %p167, %p168
    %p170 = scmp.ne.s32.totalorder %s159, %s160
    %p171 = scmp.eq.s32.totalorder %s25, 0
    %p172 = por %p170, %p171
    %p173 = scmp.ne.s32.totalorder %s159, %s160
    %p174 = scmp.eq.s32.totalorder %s26, 3
    %p175 = por %p173, %p174
    %p177 = scmp.ne.s32.totalorder %s160, %s176
    %p178 = scmp.eq.s32.totalorder %s26, 0
    %p179 = por %p177, %p178
    %p180 = scmp.le.s32.totalorder 1, %s20
    %p181 = scmp.lt.s32.totalorder %s20, 5
    %p182 = pnand %p180, %p181
    %p183 = pneg %p182
    // Predicated region
    $region9: #{pointpillar_forward.1} parent=5 // pred_check
      _
    $region10: #{pointpillar_forward.1} parent=5 // pred_check_branch
      %185 = sbr.rel (%p182) target = $region12
    $region11: #{pointpillar_forward.1} parent=5 // pred_region
      %s186 = ssub.s32 %s20, 1
      // Predicated region
      $region13: #{pointpillar_forward.1} parent=11 // pred_check
        %p187 = pneg %p83
      $region14: #{pointpillar_forward.1} parent=11 // pred_check_branch
        %189 = sbr.rel (%p187) target = $region16
      $region15: #{pointpillar_forward.1} parent=11 // pred_region
        _
      $region16: #{pointpillar_forward.1} parent=11 // pred_fallthru
        _
      // Predicated region
      $region17: #{pointpillar_forward.1} parent=11 // pred_check
        %p190 = pneg %p104
      $region18: #{pointpillar_forward.1} parent=11 // pred_check_branch
        %192 = sbr.rel (%p190) target = $region20
      $region19: #{pointpillar_forward.1} parent=11 // pred_region
        _
      $region20: #{pointpillar_forward.1} parent=11 // pred_fallthru
        _
      // Predicated region
      $region21: #{pointpillar_forward.1} parent=11 // pred_check
        %p193 = pneg %p125
      $region22: #{pointpillar_forward.1} parent=11 // pred_check_branch
        %195 = sbr.rel (%p193) target = $region24
      $region23: #{pointpillar_forward.1} parent=11 // pred_region
        _
      $region24: #{pointpillar_forward.1} parent=11 // pred_fallthru
        _
      // Predicated region
      $region25: #{pointpillar_forward.1} parent=11 // pred_check
        %p196 = pneg %p146
      $region26: #{pointpillar_forward.1} parent=11 // pred_check_branch
        %198 = sbr.rel (%p196) target = $region28
      $region27: #{pointpillar_forward.1} parent=11 // pred_region
        _
      $region28: #{pointpillar_forward.1} parent=11 // pred_fallthru
        _
    $region12: #{pointpillar_forward.1} parent=5 // pred_fallthru
      _
    %p199 = scmp.lt.s32.totalorder %s20, 4
    // Predicated region
    $region29: #{pointpillar_forward.1} parent=5 // pred_check
      %p200 = pneg %p199
    $region30: #{pointpillar_forward.1} parent=5 // pred_check_branch
      %202 = sbr.rel (%p200) target = $region32
    $region31: #{pointpillar_forward.1} parent=5 // pred_region
      // Predicated region
      $region33: #{pointpillar_forward.1} parent=31 // pred_check
        %p203 = pneg %p56
      $region34: #{pointpillar_forward.1} parent=31 // pred_check_branch
        %205 = sbr.rel (%p203) target = $region36
      $region35: #{pointpillar_forward.1} parent=31 // pred_region
        %s206 = smul.u32 %s27, 2
        %s207 = sadd.s32 %s206, %s28
        %s208 = smul.u32 16, %s207
        %p209 = scmp.lt.s32.totalorder %s208, 63
        %s210 = scalar_select %p209, %s208, 63
        %s211 = smul.addr %s210, 4
        %s212 = scalar_lea.vmem %s1, %s211
        %s213 = smul.u32 %s27, 2
        %s214 = sadd.s32 %s213, %s28
        %s215 = smul.u32 16, %s214
      $region36: #{pointpillar_forward.1} parent=31 // pred_fallthru
        _
    $region32: #{pointpillar_forward.1} parent=5 // pred_fallthru
      _
    %p216 = scmp.le.s32.totalorder 1, %s20
    %p217 = scmp.lt.s32.totalorder %s20, 5
    %p218 = pnand %p216, %p217
    %p219 = pneg %p218
    // Predicated region
    $region37: #{pointpillar_forward.1} parent=5 // pred_check
      _
    $region38: #{pointpillar_forward.1} parent=5 // pred_check_branch
      %221 = sbr.rel (%p218) target = $region40
    $region39: #{pointpillar_forward.1} parent=5 // pred_region
      %s222 = ssub.s32 %s20, 1
      %s223 = smul.u32 %s29, 2
      %s224 = sadd.s32 %s223, %s30
      %s225 = smul.u32 16, %s224
      %p226 = scmp.lt.s32.totalorder %s225, 63
      %s227 = scalar_select %p226, %s225, 63
      %s228 = smul.addr %s227, 4
      %s229 = scalar_lea.vmem %s1, %s228
      %p230 = pneg %p62
      %p231 = pneg %p59
      %p232 = pneg %p83
      %p233 = pneg %p80
      %p234 = pneg %p104
      %p235 = pneg %p101
      %p236 = pneg %p125
      %p237 = pneg %p122
      %p238 = pneg %p146
      %p239 = pneg %p143
      %p240 = pneg %p172
      %p241 = pneg %p169
      %p242 = scmp.lt.s32.totalorder %s29, 1
      %s243 = scalar_select %p242, %s29, 1
      %s244 = smul.addr %s243, 64
      %s245 = smul.addr %s244, 8
      %s246 = scalar_lea.vmem %s6, %s245
      %s247 = smul.u32 %s29, 2
      %s248 = sadd.s32 %s247, %s30
      %s249 = smul.u32 16, %s248
      %p250 = scmp.lt.s32.totalorder %s249, 63
      %s251 = scalar_select %p250, %s249, 63
      %s252 = smul.addr %s251, 4
      %s253 = scalar_lea.vmem %s1, %s252
      %s254 = smul.u32 %s29, 2
      %s255 = sadd.s32 %s254, %s30
      %s256 = smul.u32 16, %s255
      %p257 = scmp.lt.s32.totalorder %s29, 1
      %s258 = scalar_select %p257, %s29, 1
      %s259 = smul.addr %s258, 64
      %s260 = smul.addr %s259, 8
      %s261 = scalar_lea.vmem %s6, %s260
      %p263 = scmp.eq.s32.totalorder %s30, 0
      // Predicated region
      $region41: #{pointpillar_forward.1} parent=39 // pred_check
        %p264 = pneg %p263
      $region42: #{pointpillar_forward.1} parent=39 // pred_check_branch
        %266 = sbr.rel (%p264) target = $region44
      $region43: #{pointpillar_forward.1} parent=39 // pred_region
        %267 = vst [vmem:[%s261] sm:$0xff] 0.0
        %268 = vst [vmem:[%s261 + $0x8] sm:$0xff] 0.0
        %269 = vst [vmem:[%s261 + $0x10] sm:$0xff] 0.0
        %270 = vst [vmem:[%s261 + $0x18] sm:$0xff] 0.0
        %271 = vst [vmem:[%s261 + $0x20] sm:$0xff] 0.0
        %272 = vst [vmem:[%s261 + $0x28] sm:$0xff] 0.0
        %273 = vst [vmem:[%s261 + $0x30] sm:$0xff] 0.0
        %274 = vst [vmem:[%s261 + $0x38] sm:$0xff] 0.0
        %275 = vst [vmem:[%s261 + $0x40] sm:$0xff] 0.0
        %276 = vst [vmem:[%s261 + $0x48] sm:$0xff] 0.0
        %277 = vst [vmem:[%s261 + $0x50] sm:$0xff] 0.0
        %278 = vst [vmem:[%s261 + $0x58] sm:$0xff] 0.0
        %279 = vst [vmem:[%s261 + $0x60] sm:$0xff] 0.0
        %280 = vst [vmem:[%s261 + $0x68] sm:$0xff] 0.0
        %281 = vst [vmem:[%s261 + $0x70] sm:$0xff] 0.0
        %282 = vst [vmem:[%s261 + $0x78] sm:$0xff] 0.0
        %283 = vst [vmem:[%s261 + $0x80] sm:$0xff] 0.0
        %284 = vst [vmem:[%s261 + $0x88] sm:$0xff] 0.0
        %285 = vst [vmem:[%s261 + $0x90] sm:$0xff] 0.0
        %286 = vst [vmem:[%s261 + $0x98] sm:$0xff] 0.0
        %287 = vst [vmem:[%s261 + $0xa0] sm:$0xff] 0.0
        %288 = vst [vmem:[%s261 + $0xa8] sm:$0xff] 0.0
        %289 = vst [vmem:[%s261 + $0xb0] sm:$0xff] 0.0
        %290 = vst [vmem:[%s261 + $0xb8] sm:$0xff] 0.0
        %291 = vst [vmem:[%s261 + $0xc0] sm:$0xff] 0.0
        %292 = vst [vmem:[%s261 + $0xc8] sm:$0xff] 0.0
        %293 = vst [vmem:[%s261 + $0xd0] sm:$0xff] 0.0
        %294 = vst [vmem:[%s261 + $0xd8] sm:$0xff] 0.0
        %295 = vst [vmem:[%s261 + $0xe0] sm:$0xff] 0.0
        %296 = vst [vmem:[%s261 + $0xe8] sm:$0xff] 0.0
        %297 = vst [vmem:[%s261 + $0xf0] sm:$0xff] 0.0
        %298 = vst [vmem:[%s261 + $0xf8] sm:$0xff] 0.0
        %299 = vst [vmem:[%s261 + $0x100] sm:$0xff] 0.0
        %300 = vst [vmem:[%s261 + $0x108] sm:$0xff] 0.0
        %301 = vst [vmem:[%s261 + $0x110] sm:$0xff] 0.0
        %302 = vst [vmem:[%s261 + $0x118] sm:$0xff] 0.0
        %303 = vst [vmem:[%s261 + $0x120] sm:$0xff] 0.0
        %304 = vst [vmem:[%s261 + $0x128] sm:$0xff] 0.0
        %305 = vst [vmem:[%s261 + $0x130] sm:$0xff] 0.0
        %306 = vst [vmem:[%s261 + $0x138] sm:$0xff] 0.0
        %307 = vst [vmem:[%s261 + $0x140] sm:$0xff] 0.0
        %308 = vst [vmem:[%s261 + $0x148] sm:$0xff] 0.0
        %309 = vst [vmem:[%s261 + $0x150] sm:$0xff] 0.0
        %310 = vst [vmem:[%s261 + $0x158] sm:$0xff] 0.0
        %311 = vst [vmem:[%s261 + $0x160] sm:$0xff] 0.0
        %312 = vst [vmem:[%s261 + $0x168] sm:$0xff] 0.0
        %313 = vst [vmem:[%s261 + $0x170] sm:$0xff] 0.0
        %314 = vst [vmem:[%s261 + $0x178] sm:$0xff] 0.0
        %315 = vst [vmem:[%s261 + $0x180] sm:$0xff] 0.0
        %316 = vst [vmem:[%s261 + $0x188] sm:$0xff] 0.0
        %317 = vst [vmem:[%s261 + $0x190] sm:$0xff] 0.0
        %318 = vst [vmem:[%s261 + $0x198] sm:$0xff] 0.0
        %319 = vst [vmem:[%s261 + $0x1a0] sm:$0xff] 0.0
        %320 = vst [vmem:[%s261 + $0x1a8] sm:$0xff] 0.0
        %321 = vst [vmem:[%s261 + $0x1b0] sm:$0xff] 0.0
        %322 = vst [vmem:[%s261 + $0x1b8] sm:$0xff] 0.0
        %323 = vst [vmem:[%s261 + $0x1c0] sm:$0xff] 0.0
        %324 = vst [vmem:[%s261 + $0x1c8] sm:$0xff] 0.0
        %325 = vst [vmem:[%s261 + $0x1d0] sm:$0xff] 0.0
        %326 = vst [vmem:[%s261 + $0x1d8] sm:$0xff] 0.0
        %327 = vst [vmem:[%s261 + $0x1e0] sm:$0xff] 0.0
        %328 = vst [vmem:[%s261 + $0x1e8] sm:$0xff] 0.0
        %329 = vst [vmem:[%s261 + $0x1f0] sm:$0xff] 0.0
        %330 = vst [vmem:[%s261 + $0x1f8] sm:$0xff] 0.0
      $region44: #{pointpillar_forward.1} parent=39 // pred_fallthru
        _
      %v331 = vld [vmem:[%s253] sm:$0xf]
      %v332 = vld [vmem:[%s253 + $0x4] sm:$0xf]
      %v333 = vld [vmem:[%s253 + $0x8] sm:$0xf]
      %v334 = vld [vmem:[%s253 + $0xc] sm:$0xf]
      %v335 = vld [vmem:[%s253 + $0x10] sm:$0xf]
      %v336 = vld [vmem:[%s253 + $0x14] sm:$0xf]
      %v337 = vld [vmem:[%s253 + $0x18] sm:$0xf]
      %v338 = vld [vmem:[%s253 + $0x1c] sm:$0xf]
      %v339 = vld [vmem:[%s253 + $0x20] sm:$0xf]
      %v340 = vld [vmem:[%s253 + $0x24] sm:$0xf]
      %v341 = vld [vmem:[%s253 + $0x28] sm:$0xf]
      %v342 = vld [vmem:[%s253 + $0x2c] sm:$0xf]
      %v343 = vld [vmem:[%s253 + $0x30] sm:$0xf]
      %v344 = vld [vmem:[%s253 + $0x34] sm:$0xf]
      %v345 = vld [vmem:[%s253 + $0x38] sm:$0xf]
      %v346 = vld [vmem:[%s253 + $0x3c] sm:$0xf]
      %v347 = vld [vmem:[%s2] sm:$0xf]
      %v348 = vld [vmem:[%s2 + $0x4] sm:$0x1]
      %v349 = vld [vmem:[%s3] sm:$0x1]
      %v351 = vperm.slane %v349, 0
      %v369 = vunpack.c.l.b16 %v331
      %v370 = vunpack.c.l.b16 %v332
      %v371 = vunpack.c.l.b16 %v333
      %v372 = vunpack.c.l.b16 %v334
      %v373 = vunpack.c.l.b16 %v335
      %v374 = vunpack.c.l.b16 %v336
      %v375 = vunpack.c.l.b16 %v337
      %v376 = vunpack.c.l.b16 %v338
      %v377 = vunpack.c.l.b16 %v339
      %v378 = vunpack.c.l.b16 %v340
      %v379 = vunpack.c.l.b16 %v341
      %v380 = vunpack.c.l.b16 %v342
      %v381 = vunpack.c.l.b16 %v343
      %v382 = vunpack.c.l.b16 %v344
      %v383 = vunpack.c.l.b16 %v345
      %v384 = vunpack.c.l.b16 %v346
      %v385 = vpack.c.b16 %v370, %v369
      %v386 = vpack.c.b16 %v372, %v371
      %v387 = vpack.c.b16 %v374, %v373
      %v388 = vpack.c.b16 %v376, %v375
      %v389 = vpack.c.b16 %v378, %v377
      %v390 = vpack.c.b16 %v380, %v379
      %v391 = vpack.c.b16 %v382, %v381
      %v392 = vpack.c.b16 %v384, %v383
      %v395 = vunpack.c.l.b16 %v347
      %v396 = vunpack.c.l.b16 %v348
      %v397 = vpack.c.b16 %v396, %v395
      %vm398 = vcmask 72704
      %v400 = vsel %vm398, %v385, 0
      %v403 = vsel %vm398, %v386, 0
      %v406 = vsel %vm398, %v387, 0
      %v409 = vsel %vm398, %v388, 0
      %v412 = vsel %vm398, %v389, 0
      %v415 = vsel %vm398, %v390, 0
      %v418 = vsel %vm398, %v391, 0
      %v421 = vsel %vm398, %v392, 0
      %vm423 = vcmask 1043456
      %vm424 = vcmask 1044480
      %v425 = vsel %vm423, 4294967295, 65535
      %v426 = vsel %vm424, %v425, 0
      %v428 = vand.u32 %v397, %v426
      %430 = vmatpush.bf16.msra.mxu0 0
      %431 = vmatpush.bf16.msra.mxu0 0
      %432 = vmatpush.bf16.msra.mxu0 0
      %433 = vmatpush.bf16.msra.mxu0 0
      %434 = vmatpush.bf16.msra.mxu0 0
      %435 = vmatpush.bf16.msra.mxu0 0
      %436 = vmatpush.bf16.msra.mxu0 0
      %437 = vmatpush.bf16.msra.mxu0 %v428
      %438 = vmatmul.bf16.gmra.mxu0 %v400
      %v439 = vpop.f32.mrf.mxu0
      %v440 = vadd.f32 %v351, %v439
      %v441 = vpop.f32.mrf.mxu0
      %v442 = vadd.f32 %v351, %v441
      %443 = vmatmul.bf16.gmra.mxu0 %v403
      %v444 = vpop.f32.mrf.mxu0
      %v445 = vadd.f32 %v351, %v444
      %v446 = vpop.f32.mrf.mxu0
      %v447 = vadd.f32 %v351, %v446
      %448 = vmatmul.bf16.gmra.mxu0 %v406
      %v449 = vpop.f32.mrf.mxu0
      %v450 = vadd.f32 %v351, %v449
      %v451 = vpop.f32.mrf.mxu0
      %v452 = vadd.f32 %v351, %v451
      %453 = vmatmul.bf16.gmra.mxu0 %v409
      %v454 = vpop.f32.mrf.mxu0
      %v455 = vadd.f32 %v351, %v454
      %v456 = vpop.f32.mrf.mxu0
      %v457 = vadd.f32 %v351, %v456
      %458 = vmatmul.bf16.gmra.mxu0 %v412
      %v459 = vpop.f32.mrf.mxu0
      %v460 = vadd.f32 %v351, %v459
      %v461 = vpop.f32.mrf.mxu0
      %v462 = vadd.f32 %v351, %v461
      %463 = vmatmul.bf16.gmra.mxu0 %v415
      %v464 = vpop.f32.mrf.mxu0
      %v465 = vadd.f32 %v351, %v464
      %v466 = vpop.f32.mrf.mxu0
      %v467 = vadd.f32 %v351, %v466
      %468 = vmatmul.bf16.gmra.mxu0 %v418
      %v469 = vpop.f32.mrf.mxu0
      %v470 = vadd.f32 %v351, %v469
      %v471 = vpop.f32.mrf.mxu0
      %v472 = vadd.f32 %v351, %v471
      %473 = vmatmul.bf16.gmra.mxu0 %v421
      %v474 = vpop.f32.mrf.mxu0
      %v475 = vadd.f32 %v351, %v474
      %v476 = vpop.f32.mrf.mxu0
      %v477 = vadd.f32 %v351, %v476
      %478 = vdwg.mxu0
      %v479 = vmax.f32 %v440, 0.0
      %v480 = vmax.f32 %v442, 0.0
      %v481 = vmax.f32 %v445, 0.0
      %v482 = vmax.f32 %v447, 0.0
      %v483 = vmax.f32 %v450, 0.0
      %v484 = vmax.f32 %v452, 0.0
      %v485 = vmax.f32 %v455, 0.0
      %v486 = vmax.f32 %v457, 0.0
      %v487 = vmax.f32 %v460, 0.0
      %v488 = vmax.f32 %v462, 0.0
      %v489 = vmax.f32 %v465, 0.0
      %v490 = vmax.f32 %v467, 0.0
      %v491 = vmax.f32 %v470, 0.0
      %v492 = vmax.f32 %v472, 0.0
      %v493 = vmax.f32 %v475, 0.0
      %v494 = vmax.f32 %v477, 0.0
      %v495 = vpack.c.bf16 %v480, %v479
      %v496 = vpack.c.bf16 %v482, %v481
      %v497 = vpack.c.bf16 %v484, %v483
      %v498 = vpack.c.bf16 %v486, %v485
      %v499 = vpack.c.bf16 %v488, %v487
      %v500 = vpack.c.bf16 %v490, %v489
      %v501 = vpack.c.bf16 %v492, %v491
      %v502 = vpack.c.bf16 %v494, %v493
      %v503 = vld [vmem:[%s4] sm:$0xf]
      %v504 = vld [vmem:[%s4 + $0x4] sm:$0xf]
      %v505 = vld [vmem:[%s4 + $0x8] sm:$0xf]
      %v506 = vld [vmem:[%s4 + $0xc] sm:$0xf]
      %v507 = vld [vmem:[%s5] sm:$0x1]
      %v509 = vperm.slane %v507, 0
      %v515 = vunpack.c.l.b16 %v503
      %v516 = vunpack.c.l.b16 %v504
      %v517 = vunpack.c.l.b16 %v505
      %v518 = vunpack.c.l.b16 %v506
      %v519 = vpack.c.b16 %v516, %v515
      %v520 = vpack.c.b16 %v518, %v517
      %vm523 = vcmask 261120
      %v525 = vsel %vm523, %v495, 0
      %v528 = vsel %vm523, %v496, 0
      %v531 = vsel %vm523, %v497, 0
      %v534 = vsel %vm523, %v498, 0
      %v537 = vsel %vm523, %v499, 0
      %v540 = vsel %vm523, %v500, 0
      %v543 = vsel %vm523, %v501, 0
      %v546 = vsel %vm523, %v502, 0
      %548 = vmatpush.bf16.msra.mxu0 0
      %549 = vmatpush.bf16.msra.mxu0 0
      %550 = vmatpush.bf16.msra.mxu0 0
      %551 = vmatpush.bf16.msra.mxu0 0
      %552 = vmatpush.bf16.msra.mxu0 0
      %553 = vmatpush.bf16.msra.mxu0 0
      %554 = vmatpush.bf16.msra.mxu0 %v520
      %555 = vmatpush.bf16.msra.mxu0 %v519
      %556 = vmatmul.bf16.gmra.mxu0 %v525
      %v557 = vpop.f32.mrf.mxu0
      %v558 = vadd.f32 %v509, %v557
      %v559 = vpop.f32.mrf.mxu0
      %v560 = vadd.f32 %v509, %v559
      %561 = vmatmul.bf16.gmra.mxu0 %v528
      %v562 = vpop.f32.mrf.mxu0
      %v563 = vadd.f32 %v509, %v562
      %v564 = vpop.f32.mrf.mxu0
      %v565 = vadd.f32 %v509, %v564
      %566 = vmatmul.bf16.gmra.mxu0 %v531
      %v567 = vpop.f32.mrf.mxu0
      %v568 = vadd.f32 %v509, %v567
      %v569 = vpop.f32.mrf.mxu0
      %v570 = vadd.f32 %v509, %v569
      %571 = vmatmul.bf16.gmra.mxu0 %v534
      %v572 = vpop.f32.mrf.mxu0
      %v573 = vadd.f32 %v509, %v572
      %v574 = vpop.f32.mrf.mxu0
      %v575 = vadd.f32 %v509, %v574
      %576 = vmatmul.bf16.gmra.mxu0 %v537
      %v577 = vpop.f32.mrf.mxu0
      %v578 = vadd.f32 %v509, %v577
      %v579 = vpop.f32.mrf.mxu0
      %v580 = vadd.f32 %v509, %v579
      %581 = vmatmul.bf16.gmra.mxu0 %v540
      %v582 = vpop.f32.mrf.mxu0
      %v583 = vadd.f32 %v509, %v582
      %v584 = vpop.f32.mrf.mxu0
      %v585 = vadd.f32 %v509, %v584
      %586 = vmatmul.bf16.gmra.mxu0 %v543
      %v587 = vpop.f32.mrf.mxu0
      %v588 = vadd.f32 %v509, %v587
      %v589 = vpop.f32.mrf.mxu0
      %v590 = vadd.f32 %v509, %v589
      %591 = vmatmul.bf16.gmra.mxu0 %v546
      %v592 = vpop.f32.mrf.mxu0
      %v593 = vadd.f32 %v509, %v592
      %v594 = vpop.f32.mrf.mxu0
      %v595 = vadd.f32 %v509, %v594
      %596 = vdwg.mxu0
      %v597 = vmax.f32 %v558, 0.0
      %v598 = vmax.f32 %v560, 0.0
      %v599 = vmax.f32 %v563, 0.0
      %v600 = vmax.f32 %v565, 0.0
      %v601 = vmax.f32 %v568, 0.0
      %v602 = vmax.f32 %v570, 0.0
      %v603 = vmax.f32 %v573, 0.0
      %v604 = vmax.f32 %v575, 0.0
      %v605 = vmax.f32 %v578, 0.0
      %v606 = vmax.f32 %v580, 0.0
      %v607 = vmax.f32 %v583, 0.0
      %v608 = vmax.f32 %v585, 0.0
      %v609 = vmax.f32 %v588, 0.0
      %v610 = vmax.f32 %v590, 0.0
      %v611 = vmax.f32 %v593, 0.0
      %v612 = vmax.f32 %v595, 0.0
      %613 = vst [vmem:[#allocation2] sm:$0xff] %v597
      %614 = vst [vmem:[#allocation2 + $0x8] sm:$0xff] %v598
      %615 = vst [vmem:[#allocation2 + $0x10] sm:$0xff] %v599
      %616 = vst [vmem:[#allocation2 + $0x18] sm:$0xff] %v600
      %617 = vst [vmem:[#allocation2 + $0x20] sm:$0xff] %v601
      %618 = vst [vmem:[#allocation2 + $0x28] sm:$0xff] %v602
      %619 = vst [vmem:[#allocation2 + $0x30] sm:$0xff] %v603
      %620 = vst [vmem:[#allocation2 + $0x38] sm:$0xff] %v604
      %621 = vst [vmem:[#allocation2 + $0x40] sm:$0xff] %v605
      %622 = vst [vmem:[#allocation2 + $0x48] sm:$0xff] %v606
      %623 = vst [vmem:[#allocation2 + $0x50] sm:$0xff] %v607
      %624 = vst [vmem:[#allocation2 + $0x58] sm:$0xff] %v608
      %625 = vst [vmem:[#allocation2 + $0x60] sm:$0xff] %v609
      %626 = vst [vmem:[#allocation2 + $0x68] sm:$0xff] %v610
      %627 = vst [vmem:[#allocation2 + $0x70] sm:$0xff] %v611
      %628 = vst [vmem:[#allocation2 + $0x78] sm:$0xff] %v612
      %s629 = smul.u32 %s29, 2
      %s630 = sadd.s32 %s629, %s30
      %s631 = smul.u32 %s630, 128
      loop: start=0, step=1, limit=16
      $region45: #{pointpillar_forward.1} parent=39 // loop_pre_header
        _
      $region46: #{pointpillar_forward.1} parent=39 // loop_header
        %s633 = sphi 0, %s637
        %p634 = scmp.ge.s32.totalorder %s633, 16
      $region47: #{pointpillar_forward.1} parent=39 // loop_header_branch
        %636 = sbr.rel (%p634) target = $region51
      $region48: #{pointpillar_forward.1} parent=39 // loop_body
        %s638 = smul.u32 %s633, 8
        %s639 = sadd.s32 %s631, %s638
        %s640 = sld [smem:[#allocation4 + %s639]]
        %p641 = scmp.ge.s32.totalorder %s640, 0
        // Predicated region
        $region52: #{pointpillar_forward.1} parent=48 // pred_check
          %p642 = pneg %p641
        $region53: #{pointpillar_forward.1} parent=48 // pred_check_branch
          %644 = sbr.rel (%p642) target = $region55
        $region54: #{pointpillar_forward.1} parent=48 // pred_region
          %s645 = scalar_lea.vmem %s261, %s640
          %v646 = vld [vmem:[%s645] sm:$0x1]
          %s647 = scalar_lea.vmem [#allocation2], %s638
          %v648 = vld [vmem:[%s647] sm:$0x1]
          %v649 = vmax.f32 %v646, %v648
          %650 = vst [vmem:[%s645] sm:$0x1] %v649
        $region55: #{pointpillar_forward.1} parent=48 // pred_fallthru
          _
        %s651 = sadd.s32 %s638, 1
        %s652 = sadd.s32 %s631, %s651
        %s653 = sld [smem:[#allocation4 + %s652]]
        %p654 = scmp.ge.s32.totalorder %s653, 0
        // Predicated region
        $region56: #{pointpillar_forward.1} parent=48 // pred_check
          %p655 = pneg %p654
        $region57: #{pointpillar_forward.1} parent=48 // pred_check_branch
          %657 = sbr.rel (%p655) target = $region59
        $region58: #{pointpillar_forward.1} parent=48 // pred_region
          %s658 = scalar_lea.vmem %s261, %s653
          %v659 = vld [vmem:[%s658] sm:$0x1]
          %s660 = scalar_lea.vmem [#allocation2], %s651
          %v661 = vld [vmem:[%s660] sm:$0x1]
          %v662 = vmax.f32 %v659, %v661
          %663 = vst [vmem:[%s658] sm:$0x1] %v662
        $region59: #{pointpillar_forward.1} parent=48 // pred_fallthru
          _
        %s664 = sadd.s32 %s638, 2
        %s665 = sadd.s32 %s631, %s664
        %s666 = sld [smem:[#allocation4 + %s665]]
        %p667 = scmp.ge.s32.totalorder %s666, 0
        // Predicated region
        $region60: #{pointpillar_forward.1} parent=48 // pred_check
          %p668 = pneg %p667
        $region61: #{pointpillar_forward.1} parent=48 // pred_check_branch
          %670 = sbr.rel (%p668) target = $region63
        $region62: #{pointpillar_forward.1} parent=48 // pred_region
          %s671 = scalar_lea.vmem %s261, %s666
          %v672 = vld [vmem:[%s671] sm:$0x1]
          %s673 = scalar_lea.vmem [#allocation2], %s664
          %v674 = vld [vmem:[%s673] sm:$0x1]
          %v675 = vmax.f32 %v672, %v674
          %676 = vst [vmem:[%s671] sm:$0x1] %v675
        $region63: #{pointpillar_forward.1} parent=48 // pred_fallthru
          _
        %s677 = sadd.s32 %s638, 3
        %s678 = sadd.s32 %s631, %s677
        %s679 = sld [smem:[#allocation4 + %s678]]
        %p680 = scmp.ge.s32.totalorder %s679, 0
        // Predicated region
        $region64: #{pointpillar_forward.1} parent=48 // pred_check
          %p681 = pneg %p680
        $region65: #{pointpillar_forward.1} parent=48 // pred_check_branch
          %683 = sbr.rel (%p681) target = $region67
        $region66: #{pointpillar_forward.1} parent=48 // pred_region
          %s684 = scalar_lea.vmem %s261, %s679
          %v685 = vld [vmem:[%s684] sm:$0x1]
          %s686 = scalar_lea.vmem [#allocation2], %s677
          %v687 = vld [vmem:[%s686] sm:$0x1]
          %v688 = vmax.f32 %v685, %v687
          %689 = vst [vmem:[%s684] sm:$0x1] %v688
        $region67: #{pointpillar_forward.1} parent=48 // pred_fallthru
          _
        %s690 = sadd.s32 %s638, 4
        %s691 = sadd.s32 %s631, %s690
        %s692 = sld [smem:[#allocation4 + %s691]]
        %p693 = scmp.ge.s32.totalorder %s692, 0
        // Predicated region
        $region68: #{pointpillar_forward.1} parent=48 // pred_check
          %p694 = pneg %p693
        $region69: #{pointpillar_forward.1} parent=48 // pred_check_branch
          %696 = sbr.rel (%p694) target = $region71
        $region70: #{pointpillar_forward.1} parent=48 // pred_region
          %s697 = scalar_lea.vmem %s261, %s692
          %v698 = vld [vmem:[%s697] sm:$0x1]
          %s699 = scalar_lea.vmem [#allocation2], %s690
          %v700 = vld [vmem:[%s699] sm:$0x1]
          %v701 = vmax.f32 %v698, %v700
          %702 = vst [vmem:[%s697] sm:$0x1] %v701
        $region71: #{pointpillar_forward.1} parent=48 // pred_fallthru
          _
        %s703 = sadd.s32 %s638, 5
        %s704 = sadd.s32 %s631, %s703
        %s705 = sld [smem:[#allocation4 + %s704]]
        %p706 = scmp.ge.s32.totalorder %s705, 0
        // Predicated region
        $region72: #{pointpillar_forward.1} parent=48 // pred_check
          %p707 = pneg %p706
        $region73: #{pointpillar_forward.1} parent=48 // pred_check_branch
          %709 = sbr.rel (%p707) target = $region75
        $region74: #{pointpillar_forward.1} parent=48 // pred_region
          %s710 = scalar_lea.vmem %s261, %s705
          %v711 = vld [vmem:[%s710] sm:$0x1]
          %s712 = scalar_lea.vmem [#allocation2], %s703
          %v713 = vld [vmem:[%s712] sm:$0x1]
          %v714 = vmax.f32 %v711, %v713
          %715 = vst [vmem:[%s710] sm:$0x1] %v714
        $region75: #{pointpillar_forward.1} parent=48 // pred_fallthru
          _
        %s716 = sadd.s32 %s638, 6
        %s717 = sadd.s32 %s631, %s716
        %s718 = sld [smem:[#allocation4 + %s717]]
        %p719 = scmp.ge.s32.totalorder %s718, 0
        // Predicated region
        $region76: #{pointpillar_forward.1} parent=48 // pred_check
          %p720 = pneg %p719
        $region77: #{pointpillar_forward.1} parent=48 // pred_check_branch
          %722 = sbr.rel (%p720) target = $region79
        $region78: #{pointpillar_forward.1} parent=48 // pred_region
          %s723 = scalar_lea.vmem %s261, %s718
          %v724 = vld [vmem:[%s723] sm:$0x1]
          %s725 = scalar_lea.vmem [#allocation2], %s716
          %v726 = vld [vmem:[%s725] sm:$0x1]
          %v727 = vmax.f32 %v724, %v726
          %728 = vst [vmem:[%s723] sm:$0x1] %v727
        $region79: #{pointpillar_forward.1} parent=48 // pred_fallthru
          _
        %s729 = sadd.s32 %s638, 7
        %s730 = sadd.s32 %s631, %s729
        %s731 = sld [smem:[#allocation4 + %s730]]
        %p732 = scmp.ge.s32.totalorder %s731, 0
        // Predicated region
        $region80: #{pointpillar_forward.1} parent=48 // pred_check
          %p733 = pneg %p732
        $region81: #{pointpillar_forward.1} parent=48 // pred_check_branch
          %735 = sbr.rel (%p733) target = $region83
        $region82: #{pointpillar_forward.1} parent=48 // pred_region
          %s736 = scalar_lea.vmem %s261, %s731
          %v737 = vld [vmem:[%s736] sm:$0x1]
          %s738 = scalar_lea.vmem [#allocation2], %s729
          %v739 = vld [vmem:[%s738] sm:$0x1]
          %v740 = vmax.f32 %v737, %v739
          %741 = vst [vmem:[%s736] sm:$0x1] %v740
        $region83: #{pointpillar_forward.1} parent=48 // pred_fallthru
          _
      $region49: #{pointpillar_forward.1} parent=39 // loop_footer
        %s637 = sadd.s32 1, %s633
      $region50: #{pointpillar_forward.1} parent=39 // loop_footer_branch
        %632 = sbr.rel target = $region46
      $region51: #{pointpillar_forward.1} parent=39 // loop_exit
        _
      %p742 = scmp.lt.s32.totalorder %s29, 1
      %s743 = scalar_select %p742, %s29, 1
      %s744 = smul.addr %s743, 64
      %s745 = smul.addr %s744, 8
      %s746 = scalar_lea.vmem %s6, %s745
      // Predicated region
      $region84: #{pointpillar_forward.1} parent=39 // pred_check
        %p747 = pneg %p169
      $region85: #{pointpillar_forward.1} parent=39 // pred_check_branch
        %749 = sbr.rel (%p747) target = $region87
      $region86: #{pointpillar_forward.1} parent=39 // pred_region
        _
      $region87: #{pointpillar_forward.1} parent=39 // pred_fallthru
        _
    $region40: #{pointpillar_forward.1} parent=5 // pred_fallthru
      _
    %p750 = scmp.le.s32.totalorder 2, %s20
    // Predicated region
    $region88: #{pointpillar_forward.1} parent=5 // pred_check
      %p751 = pneg %p750
    $region89: #{pointpillar_forward.1} parent=5 // pred_check_branch
      %753 = sbr.rel (%p751) target = $region91
    $region90: #{pointpillar_forward.1} parent=5 // pred_region
      %s754 = ssub.s32 %s20, 2
      // Predicated region
      $region92: #{pointpillar_forward.1} parent=90 // pred_check
        %p755 = pneg %p175
      $region93: #{pointpillar_forward.1} parent=90 // pred_check_branch
        %757 = sbr.rel (%p755) target = $region95
      $region94: #{pointpillar_forward.1} parent=90 // pred_region
        %p758 = scmp.lt.s32.totalorder %s31, 1
        %s759 = scalar_select %p758, %s31, 1
        %s760 = smul.addr %s759, 64
        %s761 = smul.addr %s760, 8
        %s762 = scalar_lea.vmem %s6, %s761
      $region95: #{pointpillar_forward.1} parent=90 // pred_fallthru
        _
    $region91: #{pointpillar_forward.1} parent=5 // pred_fallthru
      _
  $region6: #{pointpillar_forward.1} parent=0 // loop_footer
    %s24 = sadd.s32 1, %s20
  $region7: #{pointpillar_forward.1} parent=0 // loop_footer_branch
    %19 = sbr.rel target = $region3
  $region8: #{pointpillar_forward.1} parent=0 // loop_exit
    _

</llo_original>
